<compile_context>
chip_gen: v6e
topology: v6e:2x2x1
jax: 0.10.0
libtpu: 0.0.40
codegen_flags: <defaults>
</compile_context>

<pallas_src>
import functools
import math

import jax
import jax.numpy as jnp
from jax.experimental import pallas as pl
from jax.experimental.pallas import tpu as pltpu


def _round_up(x, m):
    return ((x + m - 1) // m) * m


# ----------------------------------------------------------------------------
# Kernel
# ----------------------------------------------------------------------------
def _renyi_fwd_kernel(d_state, xin_ref, w_enc_ref, w_dec_ref, bias_ref, out_ref):
    ds = d_state
    ds8 = _round_up(ds, 8)
    in_w = xin_ref.shape[1]        # packed input width: [eps | state | action | 0]
    out_w = w_enc_ref.shape[1]     # common weight column width = round_up(max(H, 2*ds), 8)

    def dot(x, w):                 # bf16 operands, f32 accumulation on the MXU
        return jnp.dot(x.astype(jnp.bfloat16), w, preferred_element_type=jnp.float32)

    def swish(v):
        return v * jax.nn.sigmoid(v)

    def bias(k):                   # (1, out_w) f32 row, sliced at point of use
        return bias_ref[k:k + 1, :]

    # ---------------- encoder: 3 swish layers + fused [mean_l | log_var_l] head
    r = 0
    x = swish(dot(xin_ref[...], w_enc_ref[r:r + in_w, :]) + bias(0)); r += in_w
    x = swish(dot(x, w_enc_ref[r:r + out_w, :]) + bias(1));           r += out_w
    x = swish(dot(x, w_enc_ref[r:r + out_w, :]) + bias(2));           r += out_w
    heads = dot(x, w_enc_ref[r:r + out_w, :]) + bias(3)   # cols [0:ds]=mean, [ds:2ds]=log_var
    mean_ = heads[:, 0:ds]
    log_var_ = jax.nn.sigmoid(heads[:, ds:2 * ds])

    # reparameterize: z = mean + sqrt(exp(log_var)) * eps == mean + exp(0.5*log_var) * eps
    eps = xin_ref[:, 0:ds]                                 # loaded just before use
    z = mean_ + jnp.exp(0.5 * log_var_) * eps

    # ---------------- decoder: 3 swish layers + fused [mu | log_var] head
    r = 0
    y = swish(dot(z, w_dec_ref[r:r + ds, :]) + bias(4));    r += ds8
    y = swish(dot(y, w_dec_ref[r:r + out_w, :]) + bias(5)); r += out_w
    y = swish(dot(y, w_dec_ref[r:r + out_w, :]) + bias(6)); r += out_w
    dheads = dot(y, w_dec_ref[r:r + out_w, :]) + bias(7)
    delta_mu = dheads[:, 0:ds]
    delta_var = jnp.exp(jax.nn.sigmoid(dheads[:, ds:2 * ds]))

    # ---------------- lane-placed output: [mean | log_var | z | dmu | dvar | 0-pad]
    out_ref[...] = jnp.zeros_like(out_ref)
    out_ref[:, 0 * ds:1 * ds] = mean_
    out_ref[:, 1 * ds:2 * ds] = log_var_
    out_ref[:, 2 * ds:3 * ds] = z
    out_ref[:, 3 * ds:4 * ds] = delta_mu
    out_ref[:, 4 * ds:5 * ds] = delta_var


# ----------------------------------------------------------------------------
# Parameter packing (one-time, outside the hot path)
# ----------------------------------------------------------------------------
def pack_params(params, d_state, d_action, hidden, weight_dtype=jnp.bfloat16):
    """Packs the 20 Linear weights/biases into 3 slabs the kernel consumes.

    All segments are padded to 8-row-aligned blocks of a common column width
    OUT = round_up(max(hidden, 2*d_state), 8).  The layer-1 segment spans the
    whole packed input slab [eps | state | action | pad] with zero rows under
    the eps / pad columns.
    """
    (w1, b1, w2, b2, w3, b3, wm, bm, wlv, blv,
     w4, b4, w5, b5, w6, b6, wmu, bmu, wdv, bdv) = params

    ds, da, H = d_state, d_action, hidden
    out_w = _round_up(max(H, 2 * ds), 8)       # common weight column width
    in_w = _round_up(2 * ds + da, 8)           # input slab width
    ds8 = _round_up(ds, 8)

    def seg(w, rows, row_off=0):
        w = jnp.asarray(w, jnp.float32)
        blk = jnp.zeros((rows, out_w), jnp.float32)
        return blk.at[row_off:row_off + w.shape[0], :w.shape[1]].set(w)

    def fuse(wa, wb):
        return jnp.concatenate([jnp.asarray(wa, jnp.float32),
                                jnp.asarray(wb, jnp.float32)], axis=-1)

    # encoder slab: [layer1 (in_w rows) | w2 | w3 | fused head], each out_w cols
    w_enc = jnp.concatenate([
        seg(w1, in_w, row_off=ds),     # rows [ds : ds+ds+da] = w1; eps/pad rows = 0
        seg(w2, out_w),
        seg(w3, out_w),
        seg(fuse(wm, wlv), out_w),     # cols [0:ds]=mean_l, [ds:2ds]=log_var_l
    ], axis=0).astype(weight_dtype)

    # decoder slab: [w4 (ds8 rows) | w5 | w6 | fused head]
    w_dec = jnp.concatenate([
        seg(w4, ds8),
        seg(w5, out_w),
        seg(w6, out_w),
        seg(fuse(wmu, wdv), out_w),    # cols [0:ds]=mu, [ds:2ds]=log_var
    ], axis=0).astype(weight_dtype)

    def brow(*bs):
        b = jnp.concatenate([jnp.reshape(jnp.asarray(x, jnp.float32), (-1,)) for x in bs])
        return jnp.pad(b, (0, out_w - b.shape[0]))[None, :]

    biases = jnp.concatenate([
        brow(b1), brow(b2), brow(b3), brow(bm, blv),
        brow(b4), brow(b5), brow(b6), brow(bmu, bdv),
    ], axis=0)                                  # (8, out_w) float32

    return w_enc, w_dec, biases


# ----------------------------------------------------------------------------
# Forward wrapper
# ----------------------------------------------------------------------------
@jax.jit
def renyi_div_forward(state, action, eps, w_enc, w_dec, biases):
    """state (B,ds), action (B,da), eps (B,ds) ~ N(0,I); packed params.

    Returns (mean_, log_var_, z, delta_mu, delta_var), each (B, ds) float32.
    """
    B, ds = state.shape
    da = action.shape[1]
    out_w = w_enc.shape[1]
    in_w = _round_up(2 * ds + da, 8)
    assert w_enc.shape[0] == in_w + 3 * out_w, "packed encoder slab inconsistent"
    assert w_dec.shape[0] == _round_up(ds, 8) + 3 * out_w, "packed decoder slab inconsistent"

    # One packed activation slab: [eps | state | action | zero-pad].  eps is
    # first so the in-kernel eps slice starts at lane 0.
    xin = jnp.concatenate([eps, state, action], axis=-1).astype(jnp.float32)
    if in_w > xin.shape[1]:
        xin = jnp.pad(xin, ((0, 0), (0, in_w - xin.shape[1])))

    # Batch tiling: big sublane-aligned tiles (per-step overhead dominates at
    # these tiny feature dims).  Large single-tile batches are split into an
    # even 2-step parallel grid so dual-TC parts (v7x) use both TensorCores.
    b_al = _round_up(B, 8)
    TB_CAP = 1024
    if b_al > TB_CAP:
        tb = TB_CAP
    elif b_al >= 512:
        tb = _round_up((b_al + 1) // 2, 8)
    else:
        tb = b_al
    b_pad = _round_up(b_al, tb)
    if b_pad != B:
        xin = jnp.pad(xin, ((0, b_pad - B), (0, 0)))

    p_cols = _round_up(5 * ds, 128)            # lane-dense coalesced output

    cost = pl.CostEstimate(
        flops=2 * b_pad * (w_enc.shape[0] + w_dec.shape[0]) * out_w,
        transcendentals=b_pad * (6 * out_w + 3 * ds),
        bytes_accessed=(xin.size * 4
                        + w_enc.size * w_enc.dtype.itemsize
                        + w_dec.size * w_dec.dtype.itemsize
                        + biases.size * 4
                        + b_pad * p_cols * 4),
    )

    kernel = functools.partial(_renyi_fwd_kernel, ds)

    out = pl.pallas_call(
        kernel,
        out_shape=jax.ShapeDtypeStruct((b_pad, p_cols), jnp.float32),
        grid=(b_pad // tb,),
        in_specs=[
            pl.BlockSpec((tb, in_w), lambda i: (i, 0)),       # packed activations
            pl.BlockSpec(w_enc.shape, lambda i: (0, 0)),      # encoder slab (VMEM-resident)
            pl.BlockSpec(w_dec.shape, lambda i: (0, 0)),      # decoder slab (VMEM-resident)
            pl.BlockSpec(biases.shape, lambda i: (0, 0)),     # bias slab    (VMEM-resident)
        ],
        out_specs=pl.BlockSpec((tb, p_cols), lambda i: (i, 0)),
        compiler_params=pltpu.CompilerParams(
            dimension_semantics=("parallel",)),
        cost_estimate=cost,
    )(xin, w_enc, w_dec, biases)

    out = out[:B]
    return (out[:, 0:ds], out[:, ds:2 * ds], out[:, 2 * ds:3 * ds],
            out[:, 3 * ds:4 * ds], out[:, 4 * ds:5 * ds])


# ----------------------------------------------------------------------------
# Init (xavier_uniform weights, zero biases) and pure-JAX references
# ----------------------------------------------------------------------------
def _xavier_uniform(key, fan_in, fan_out):
    limit = math.sqrt(6.0 / (fan_in + fan_out))
    return jax.random.uniform(key, (fan_in, fan_out),
                              minval=-limit, maxval=limit, dtype=jnp.float32)


def init_params(key, d_state, d_action, hidden_size):
    dims = [
        (d_state + d_action, hidden_size),  # linear1
        (hidden_size, hidden_size),         # linear2
        (hidden_size, hidden_size),         # linear3
        (hidden_size, d_state),             # mean_l
        (hidden_size, d_state),             # log_var_l
        (d_state, hidden_size),             # linear4
        (hidden_size, hidden_size),         # linear5
        (hidden_size, hidden_size),         # linear6
        (hidden_size, d_state),             # mu
        (hidden_size, d_state),             # log_var
    ]
    params = []
    keys = jax.random.split(key, len(dims))
    for k, (fi, fo) in zip(keys, dims):
        params.append(_xavier_uniform(k, fi, fo))            # weight (in, out)
        params.append(jnp.zeros((fo,), dtype=jnp.float32))   # bias = 0
    return params


def _reference_forward(state, action, eps, params, quant_dtype=None):
    """Pure-JAX reference.  quant_dtype=bfloat16 mimics the kernel's bf16
    weight storage + bf16 matmul operands (f32 accumulation)."""
    (w1, b1, w2, b2, w3, b3, wm, bm, wlv, blv,
     w4, b4, w5, b5, w6, b6, wmu, bmu, wdv, bdv) = params
    hp = jax.lax.Precision.HIGHEST

    def q(v):
        v = jnp.asarray(v, jnp.float32)
        if quant_dtype is None:
            return v
        return v.astype(quant_dtype).astype(jnp.float32)

    def lin(x, w, b):
        return jnp.dot(q(x), q(w), precision=hp) + jnp.asarray(b, jnp.float32)

    def swish(v):
        return v * jax.nn.sigmoid(v)

    sa = jnp.concatenate([state, action], axis=-1)
    x = swish(lin(sa, w1, b1))
    x = swish(lin(x, w2, b2))
    x = swish(lin(x, w3, b3))
    mean_ = lin(x, wm, bm)
    log_var_ = jax.nn.sigmoid(lin(x, wlv, blv))
    z = mean_ + jnp.sqrt(jnp.exp(log_var_)) * eps
    y = swish(lin(z, w4, b4))
    y = swish(lin(y, w5, b5))
    y = swish(lin(y, w6, b6))
    delta_mu = lin(y, wmu, bmu)
    delta_var = jnp.exp(jax.nn.sigmoid(lin(y, wdv, bdv)))
    return mean_, log_var_, z, delta_mu, delta_var


if __name__ == "__main__":
    B, d_state, d_action, hidden = 8, 4, 4, 32

    root = jax.random.PRNGKey(0)
    k_state, k_action, k_eps, k_params = jax.random.split(root, 4)

    state = jax.random.normal(k_state, (B, d_state), dtype=jnp.float32)
    action = jax.random.normal(k_action, (B, d_action), dtype=jnp.float32)
    # eps ~ MultivariateNormal(0, I).sample((B,)), drawn deterministically here
    eps = jax.random.normal(k_eps, (B, d_state), dtype=jnp.float32)

    params = init_params(k_params, d_state, d_action, hidden)
    w_enc, w_dec, biases = pack_params(params, d_state, d_action, hidden)

    outs = renyi_div_forward(state, action, eps, w_enc, w_dec, biases)
    outs = jax.block_until_ready(outs)

    refs_q = _reference_forward(state, action, eps, params, quant_dtype=jnp.bfloat16)
    refs_f32 = _reference_forward(state, action, eps, params)
    for got, want_q, want in zip(outs, refs_q, refs_f32):
        assert got.shape == (B, d_state)
        assert bool(jnp.all(jnp.isfinite(got)))
        # kernel math matches a bf16-weight / bf16-operand reference tightly
        assert bool(jnp.allclose(got, want_q, rtol=1e-3, atol=1e-3)), \
            float(jnp.max(jnp.abs(got - want_q)))
        # documented accepted tolerance vs the full-f32 reference (bf16 weights)
        assert bool(jnp.allclose(got, want, rtol=5e-2, atol=5e-2)), \
            float(jnp.max(jnp.abs(got - want)))

    mean_, log_var_, z, delta_mu, delta_var = outs
    # sanity: sigmoid output in (0,1), so log_var_ in (0,1) and delta_var in (1, e)
    assert bool(jnp.all(log_var_ > 0.0)) and bool(jnp.all(log_var_ < 1.0))
    assert bool(jnp.all(delta_var > 1.0)) and bool(jnp.all(delta_var < math.e))

    print("KERNEL_OK")
</pallas_src>

<mosaic_0001>
module attributes {stable_mosaic.version = 11 : i64} {
  func.func @_renyi_fwd_kernel(%arg0: i32, %arg1: memref<8x16xf32, #tpu.memory_space<vmem>>, %arg2: memref<112x32xbf16, #tpu.memory_space<vmem>>, %arg3: memref<104x32xbf16, #tpu.memory_space<vmem>>, %arg4: memref<8x32xf32, #tpu.memory_space<vmem>>, %arg5: memref<8x128xf32, #tpu.memory_space<vmem>>) attributes {dimension_semantics = [#tpu.dimension_semantics<parallel>], iteration_bounds = array<i64: 1>, scalar_prefetch = 0 : i64, scratch_operands = 0 : i64, tpu.core_type = #tpu.core_type<tc>, window_params = [{transform_indices = @transform_0, window_bounds = array<i64: 8, 16>}, {pipeline_mode = #tpu.pipeline_mode<synchronous>, transform_indices = @transform_1, window_bounds = array<i64: 112, 32>}, {pipeline_mode = #tpu.pipeline_mode<synchronous>, transform_indices = @transform_2, window_bounds = array<i64: 104, 32>}, {pipeline_mode = #tpu.pipeline_mode<synchronous>, transform_indices = @transform_3, window_bounds = array<i64: 8, 32>}, {transform_indices = @transform_4, window_bounds = array<i64: 8, 128>}]} {
    %c0 = arith.constant 0 : index
    %c0_0 = arith.constant 0 : index
    %0 = vector.load %arg1[%c0, %c0_0] : memref<8x16xf32, #tpu.memory_space<vmem>>, vector<8x16xf32>
    %c0_1 = arith.constant 0 : index
    %c0_2 = arith.constant 0 : index
    %1 = vector.load %arg2[%c0_1, %c0_2] : memref<112x32xbf16, #tpu.memory_space<vmem>>, vector<16x32xbf16>
    %2 = arith.truncf %0 : vector<8x16xf32> to vector<8x16xbf16>
    %cst = arith.constant dense<0.000000e+00> : vector<8x32xf32>
    %3 = tpu.matmul %2, %1, %cst {dimension_numbers = #tpu.dot_dimension_numbers<[1], [0], [0], [1], [0, 0, 1, 1], [], []>} : vector<8x16xbf16>, vector<16x32xbf16>, vector<8x32xf32> -> vector<8x32xf32>
    %c0_3 = arith.constant 0 : index
    %c0_4 = arith.constant 0 : index
    %4 = vector.load %arg4[%c0_3, %c0_4] : memref<8x32xf32, #tpu.memory_space<vmem>>, vector<1x32xf32>
    %5 = vector.broadcast %4 : vector<1x32xf32> to vector<8x32xf32>
    %6 = arith.addf %3, %5 : vector<8x32xf32>
    %7 = arith.negf %6 : vector<8x32xf32>
    %8 = math.exp %7 : vector<8x32xf32>
    %cst_5 = arith.constant 1.000000e+00 : f32
    %9 = vector.broadcast %cst_5 : f32 to vector<8x32xf32>
    %10 = arith.addf %9, %8 : vector<8x32xf32>
    %11 = arith.divf %9, %10 : vector<8x32xf32>
    %12 = arith.mulf %6, %11 : vector<8x32xf32>
    %c16 = arith.constant 16 : index
    %c0_6 = arith.constant 0 : index
    %13 = vector.load %arg2[%c16, %c0_6] : memref<112x32xbf16, #tpu.memory_space<vmem>>, vector<32x32xbf16>
    %14 = arith.truncf %12 : vector<8x32xf32> to vector<8x32xbf16>
    %cst_7 = arith.constant dense<0.000000e+00> : vector<8x32xf32>
    %15 = tpu.matmul %14, %13, %cst_7 {dimension_numbers = #tpu.dot_dimension_numbers<[1], [0], [0], [1], [0, 0, 1, 1], [], []>} : vector<8x32xbf16>, vector<32x32xbf16>, vector<8x32xf32> -> vector<8x32xf32>
    %c1 = arith.constant 1 : index
    %c0_8 = arith.constant 0 : index
    %16 = vector.load %arg4[%c1, %c0_8] : memref<8x32xf32, #tpu.memory_space<vmem>>, vector<1x32xf32>
    %17 = vector.broadcast %16 : vector<1x32xf32> to vector<8x32xf32>
    %18 = arith.addf %15, %17 : vector<8x32xf32>
    %19 = arith.negf %18 : vector<8x32xf32>
    %20 = math.exp %19 : vector<8x32xf32>
    %cst_9 = arith.constant 1.000000e+00 : f32
    %21 = vector.broadcast %cst_9 : f32 to vector<8x32xf32>
    %22 = arith.addf %21, %20 : vector<8x32xf32>
    %23 = arith.divf %21, %22 : vector<8x32xf32>
    %24 = arith.mulf %18, %23 : vector<8x32xf32>
    %c48 = arith.constant 48 : index
    %c0_10 = arith.constant 0 : index
    %25 = vector.load %arg2[%c48, %c0_10] : memref<112x32xbf16, #tpu.memory_space<vmem>>, vector<32x32xbf16>
    %26 = arith.truncf %24 : vector<8x32xf32> to vector<8x32xbf16>
    %cst_11 = arith.constant dense<0.000000e+00> : vector<8x32xf32>
    %27 = tpu.matmul %26, %25, %cst_11 {dimension_numbers = #tpu.dot_dimension_numbers<[1], [0], [0], [1], [0, 0, 1, 1], [], []>} : vector<8x32xbf16>, vector<32x32xbf16>, vector<8x32xf32> -> vector<8x32xf32>
    %c2 = arith.constant 2 : index
    %c0_12 = arith.constant 0 : index
    %28 = vector.load %arg4[%c2, %c0_12] : memref<8x32xf32, #tpu.memory_space<vmem>>, vector<1x32xf32>
    %29 = vector.broadcast %28 : vector<1x32xf32> to vector<8x32xf32>
    %30 = arith.addf %27, %29 : vector<8x32xf32>
    %31 = arith.negf %30 : vector<8x32xf32>
    %32 = math.exp %31 : vector<8x32xf32>
    %cst_13 = arith.constant 1.000000e+00 : f32
    %33 = vector.broadcast %cst_13 : f32 to vector<8x32xf32>
    %34 = arith.addf %33, %32 : vector<8x32xf32>
    %35 = arith.divf %33, %34 : vector<8x32xf32>
    %36 = arith.mulf %30, %35 : vector<8x32xf32>
    %c80 = arith.constant 80 : index
    %c0_14 = arith.constant 0 : index
    %37 = vector.load %arg2[%c80, %c0_14] : memref<112x32xbf16, #tpu.memory_space<vmem>>, vector<32x32xbf16>
    %38 = arith.truncf %36 : vector<8x32xf32> to vector<8x32xbf16>
    %cst_15 = arith.constant dense<0.000000e+00> : vector<8x32xf32>
    %39 = tpu.matmul %38, %37, %cst_15 {dimension_numbers = #tpu.dot_dimension_numbers<[1], [0], [0], [1], [0, 0, 1, 1], [], []>} : vector<8x32xbf16>, vector<32x32xbf16>, vector<8x32xf32> -> vector<8x32xf32>
    %c3 = arith.constant 3 : index
    %c0_16 = arith.constant 0 : index
    %40 = vector.load %arg4[%c3, %c0_16] : memref<8x32xf32, #tpu.memory_space<vmem>>, vector<1x32xf32>
    %41 = vector.broadcast %40 : vector<1x32xf32> to vector<8x32xf32>
    %42 = arith.addf %39, %41 : vector<8x32xf32>
    %43 = vector.extract_strided_slice %42 {offsets = [0, 0], sizes = [8, 4], strides = [1, 1]} : vector<8x32xf32> to vector<8x4xf32>
    %44 = vector.extract_strided_slice %42 {offsets = [0, 4], sizes = [8, 4], strides = [1, 1]} : vector<8x32xf32> to vector<8x4xf32>
    %45 = arith.negf %44 : vector<8x4xf32>
    %46 = math.exp %45 : vector<8x4xf32>
    %cst_17 = arith.constant 1.000000e+00 : f32
    %47 = vector.broadcast %cst_17 : f32 to vector<8x4xf32>
    %48 = arith.addf %47, %46 : vector<8x4xf32>
    %49 = arith.divf %47, %48 : vector<8x4xf32>
    %c0_18 = arith.constant 0 : index
    %c0_19 = arith.constant 0 : index
    %50 = vector.load %arg1[%c0_18, %c0_19] : memref<8x16xf32, #tpu.memory_space<vmem>>, vector<8x4xf32>
    %cst_20 = arith.constant 5.000000e-01 : f32
    %51 = vector.broadcast %cst_20 : f32 to vector<8x4xf32>
    %52 = arith.mulf %51, %49 : vector<8x4xf32>
    %53 = math.exp %52 : vector<8x4xf32>
    %54 = arith.mulf %53, %50 : vector<8x4xf32>
    %55 = arith.addf %43, %54 : vector<8x4xf32>
    %c0_21 = arith.constant 0 : index
    %c0_22 = arith.constant 0 : index
    %56 = vector.load %arg3[%c0_21, %c0_22] : memref<104x32xbf16, #tpu.memory_space<vmem>>, vector<4x32xbf16>
    %57 = arith.truncf %55 : vector<8x4xf32> to vector<8x4xbf16>
    %cst_23 = arith.constant dense<0.000000e+00> : vector<8x32xf32>
    %58 = tpu.matmul %57, %56, %cst_23 {dimension_numbers = #tpu.dot_dimension_numbers<[1], [0], [0], [1], [0, 0, 1, 1], [], []>} : vector<8x4xbf16>, vector<4x32xbf16>, vector<8x32xf32> -> vector<8x32xf32>
    %c4 = arith.constant 4 : index
    %c0_24 = arith.constant 0 : index
    %59 = vector.load %arg4[%c4, %c0_24] : memref<8x32xf32, #tpu.memory_space<vmem>>, vector<1x32xf32>
    %60 = vector.broadcast %59 : vector<1x32xf32> to vector<8x32xf32>
    %61 = arith.addf %58, %60 : vector<8x32xf32>
    %62 = arith.negf %61 : vector<8x32xf32>
    %63 = math.exp %62 : vector<8x32xf32>
    %cst_25 = arith.constant 1.000000e+00 : f32
    %64 = vector.broadcast %cst_25 : f32 to vector<8x32xf32>
    %65 = arith.addf %64, %63 : vector<8x32xf32>
    %66 = arith.divf %64, %65 : vector<8x32xf32>
    %67 = arith.mulf %61, %66 : vector<8x32xf32>
    %c8 = arith.constant 8 : index
    %c0_26 = arith.constant 0 : index
    %68 = vector.load %arg3[%c8, %c0_26] : memref<104x32xbf16, #tpu.memory_space<vmem>>, vector<32x32xbf16>
    %69 = arith.truncf %67 : vector<8x32xf32> to vector<8x32xbf16>
    %cst_27 = arith.constant dense<0.000000e+00> : vector<8x32xf32>
    %70 = tpu.matmul %69, %68, %cst_27 {dimension_numbers = #tpu.dot_dimension_numbers<[1], [0], [0], [1], [0, 0, 1, 1], [], []>} : vector<8x32xbf16>, vector<32x32xbf16>, vector<8x32xf32> -> vector<8x32xf32>
    %c5 = arith.constant 5 : index
    %c0_28 = arith.constant 0 : index
    %71 = vector.load %arg4[%c5, %c0_28] : memref<8x32xf32, #tpu.memory_space<vmem>>, vector<1x32xf32>
    %72 = vector.broadcast %71 : vector<1x32xf32> to vector<8x32xf32>
    %73 = arith.addf %70, %72 : vector<8x32xf32>
    %74 = arith.negf %73 : vector<8x32xf32>
    %75 = math.exp %74 : vector<8x32xf32>
    %cst_29 = arith.constant 1.000000e+00 : f32
    %76 = vector.broadcast %cst_29 : f32 to vector<8x32xf32>
    %77 = arith.addf %76, %75 : vector<8x32xf32>
    %78 = arith.divf %76, %77 : vector<8x32xf32>
    %79 = arith.mulf %73, %78 : vector<8x32xf32>
    %c40 = arith.constant 40 : index
    %c0_30 = arith.constant 0 : index
    %80 = vector.load %arg3[%c40, %c0_30] : memref<104x32xbf16, #tpu.memory_space<vmem>>, vector<32x32xbf16>
    %81 = arith.truncf %79 : vector<8x32xf32> to vector<8x32xbf16>
    %cst_31 = arith.constant dense<0.000000e+00> : vector<8x32xf32>
    %82 = tpu.matmul %81, %80, %cst_31 {dimension_numbers = #tpu.dot_dimension_numbers<[1], [0], [0], [1], [0, 0, 1, 1], [], []>} : vector<8x32xbf16>, vector<32x32xbf16>, vector<8x32xf32> -> vector<8x32xf32>
    %c6 = arith.constant 6 : index
    %c0_32 = arith.constant 0 : index
    %83 = vector.load %arg4[%c6, %c0_32] : memref<8x32xf32, #tpu.memory_space<vmem>>, vector<1x32xf32>
    %84 = vector.broadcast %83 : vector<1x32xf32> to vector<8x32xf32>
    %85 = arith.addf %82, %84 : vector<8x32xf32>
    %86 = arith.negf %85 : vector<8x32xf32>
    %87 = math.exp %86 : vector<8x32xf32>
    %cst_33 = arith.constant 1.000000e+00 : f32
    %88 = vector.broadcast %cst_33 : f32 to vector<8x32xf32>
    %89 = arith.addf %88, %87 : vector<8x32xf32>
    %90 = arith.divf %88, %89 : vector<8x32xf32>
    %91 = arith.mulf %85, %90 : vector<8x32xf32>
    %c72 = arith.constant 72 : index
    %c0_34 = arith.constant 0 : index
    %92 = vector.load %arg3[%c72, %c0_34] : memref<104x32xbf16, #tpu.memory_space<vmem>>, vector<32x32xbf16>
    %93 = arith.truncf %91 : vector<8x32xf32> to vector<8x32xbf16>
    %cst_35 = arith.constant dense<0.000000e+00> : vector<8x32xf32>
    %94 = tpu.matmul %93, %92, %cst_35 {dimension_numbers = #tpu.dot_dimension_numbers<[1], [0], [0], [1], [0, 0, 1, 1], [], []>} : vector<8x32xbf16>, vector<32x32xbf16>, vector<8x32xf32> -> vector<8x32xf32>
    %c7 = arith.constant 7 : index
    %c0_36 = arith.constant 0 : index
    %95 = vector.load %arg4[%c7, %c0_36] : memref<8x32xf32, #tpu.memory_space<vmem>>, vector<1x32xf32>
    %96 = vector.broadcast %95 : vector<1x32xf32> to vector<8x32xf32>
    %97 = arith.addf %94, %96 : vector<8x32xf32>
    %98 = vector.extract_strided_slice %97 {offsets = [0, 0], sizes = [8, 4], strides = [1, 1]} : vector<8x32xf32> to vector<8x4xf32>
    %99 = vector.extract_strided_slice %97 {offsets = [0, 4], sizes = [8, 4], strides = [1, 1]} : vector<8x32xf32> to vector<8x4xf32>
    %100 = arith.negf %99 : vector<8x4xf32>
    %101 = math.exp %100 : vector<8x4xf32>
    %cst_37 = arith.constant 1.000000e+00 : f32
    %102 = vector.broadcast %cst_37 : f32 to vector<8x4xf32>
    %103 = arith.addf %102, %101 : vector<8x4xf32>
    %104 = arith.divf %102, %103 : vector<8x4xf32>
    %105 = math.exp %104 : vector<8x4xf32>
    %cst_38 = arith.constant 0.000000e+00 : f32
    %106 = vector.broadcast %cst_38 : f32 to vector<8x128xf32>
    %c0_39 = arith.constant 0 : index
    %c0_40 = arith.constant 0 : index
    %107 = vector.load %arg5[%c0_39, %c0_40] : memref<8x128xf32, #tpu.memory_space<vmem>>, vector<8x128xf32>
    tpu.vector_store %arg5[%c0_39, %c0_40], %106 {strides = array<i32>} : memref<8x128xf32, #tpu.memory_space<vmem>>, vector<8x128xf32>,
    %c0_41 = arith.constant 0 : index
    %c0_42 = arith.constant 0 : index
    %108 = vector.load %arg5[%c0_41, %c0_42] : memref<8x128xf32, #tpu.memory_space<vmem>>, vector<8x4xf32>
    tpu.vector_store %arg5[%c0_41, %c0_42], %43 {strides = array<i32>} : memref<8x128xf32, #tpu.memory_space<vmem>>, vector<8x4xf32>,
    %c0_43 = arith.constant 0 : index
    %c4_44 = arith.constant 4 : index
    %109 = vector.load %arg5[%c0_43, %c4_44] : memref<8x128xf32, #tpu.memory_space<vmem>>, vector<8x4xf32>
    tpu.vector_store %arg5[%c0_43, %c4_44], %49 {strides = array<i32>} : memref<8x128xf32, #tpu.memory_space<vmem>>, vector<8x4xf32>,
    %c0_45 = arith.constant 0 : index
    %c8_46 = arith.constant 8 : index
    %110 = vector.load %arg5[%c0_45, %c8_46] : memref<8x128xf32, #tpu.memory_space<vmem>>, vector<8x4xf32>
    tpu.vector_store %arg5[%c0_45, %c8_46], %55 {strides = array<i32>} : memref<8x128xf32, #tpu.memory_space<vmem>>, vector<8x4xf32>,
    %c0_47 = arith.constant 0 : index
    %c12 = arith.constant 12 : index
    %111 = vector.load %arg5[%c0_47, %c12] : memref<8x128xf32, #tpu.memory_space<vmem>>, vector<8x4xf32>
    tpu.vector_store %arg5[%c0_47, %c12], %98 {strides = array<i32>} : memref<8x128xf32, #tpu.memory_space<vmem>>, vector<8x4xf32>,
    %c0_48 = arith.constant 0 : index
    %c16_49 = arith.constant 16 : index
    %112 = vector.load %arg5[%c0_48, %c16_49] : memref<8x128xf32, #tpu.memory_space<vmem>>, vector<8x4xf32>
    tpu.vector_store %arg5[%c0_48, %c16_49], %105 {strides = array<i32>} : memref<8x128xf32, #tpu.memory_space<vmem>>, vector<8x4xf32>,
    return
  }
  func.func @transform_0(%arg0: i32) -> (i32, i32) {
    %c0_i32 = arith.constant 0 : i32
    %c0_i32_0 = arith.constant 0 : i32
    return %arg0, %c0_i32 : i32, i32
  }
  func.func @transform_1(%arg0: i32) -> (i32, i32) {
    %c0_i32 = arith.constant 0 : i32
    %c0_i32_0 = arith.constant 0 : i32
    %c0_i32_1 = arith.constant 0 : i32
    return %c0_i32, %c0_i32_0 : i32, i32
  }
  func.func @transform_2(%arg0: i32) -> (i32, i32) {
    %c0_i32 = arith.constant 0 : i32
    %c0_i32_0 = arith.constant 0 : i32
    %c0_i32_1 = arith.constant 0 : i32
    return %c0_i32, %c0_i32_0 : i32, i32
  }
  func.func @transform_3(%arg0: i32) -> (i32, i32) {
    %c0_i32 = arith.constant 0 : i32
    %c0_i32_0 = arith.constant 0 : i32
    %c0_i32_1 = arith.constant 0 : i32
    return %c0_i32, %c0_i32_0 : i32, i32
  }
  func.func @transform_4(%arg0: i32) -> (i32, i32) {
    %c0_i32 = arith.constant 0 : i32
    %c0_i32_0 = arith.constant 0 : i32
    return %arg0, %c0_i32 : i32, i32
  }
}

</mosaic_0001>

<llo_original>
// kernel: renyi_div_forward.1
$region0: #{renyi_div_forward.1}
  #allocation0 [shape = 'u32[]', space=smem, size = 0x4, offset = 0x4, fixed_abs, tag = 'smem constant byte address 0x4 - core index']
  #allocation1 [shape = 'u32[144,128]{1,0:T(1,128)}', space=vmem, size = 0x12000, scoped, tag = 'internal scratch']
  %s0 = inlined_call_operand.vmem [shape: f32[8,16], index: 0, kind: input, shape index: {}]
  %s1 = inlined_call_operand.vmem [shape: bf16[112,32], index: 1, kind: input, shape index: {}]
  %s2 = inlined_call_operand.vmem [shape: bf16[104,32], index: 2, kind: input, shape index: {}]
  %s3 = inlined_call_operand.vmem [shape: f32[8,32], index: 3, kind: input, shape index: {}]
  %s4 = inlined_call_operand.vmem [shape: f32[8,128], index: 4, kind: output, shape index: {}]
  %s5 = sld [smem:[#allocation0]]
  $region26: #{renyi_div_forward.1} parent=0
    _
  %s7 = ssub.s32 1, %s5
  %s8 = scalar_select 0, %s7, %s5
  // Predicated region
  $region2: #{renyi_div_forward.1} parent=0 // pred_check
    _
  $region3: #{renyi_div_forward.1} parent=0 // pred_check_branch
    %10 = sbr.rel (0) target = $region5
  $region4: #{renyi_div_forward.1} parent=0 // pred_region
    _
  $region5: #{renyi_div_forward.1} parent=0 // pred_fallthru
    _
  // Predicated region
  $region6: #{renyi_div_forward.1} parent=0 // pred_check
    _
  $region7: #{renyi_div_forward.1} parent=0 // pred_check_branch
    %12 = sbr.rel (0) target = $region9
  $region8: #{renyi_div_forward.1} parent=0 // pred_region
    _
  $region9: #{renyi_div_forward.1} parent=0 // pred_fallthru
    _
  // Predicated region
  $region10: #{renyi_div_forward.1} parent=0 // pred_check
    _
  $region11: #{renyi_div_forward.1} parent=0 // pred_check_branch
    %14 = sbr.rel (0) target = $region13
  $region12: #{renyi_div_forward.1} parent=0 // pred_region
    _
  $region13: #{renyi_div_forward.1} parent=0 // pred_fallthru
    _
  // Predicated region
  $region14: #{renyi_div_forward.1} parent=0 // pred_check
    _
  $region15: #{renyi_div_forward.1} parent=0 // pred_check_branch
    %16 = sbr.rel (0) target = $region17
  $region16: #{renyi_div_forward.1} parent=0 // pred_region
    _
  $region17: #{renyi_div_forward.1} parent=0 // pred_fallthru
    _
  %v18 = vld [vmem:[%s0] sm:$0xff]
  %v19 = vld [vmem:[%s1] sm:$0xf]
  %v20 = vld [vmem:[%s1 + $0x4] sm:$0xf]
  %v21 = vpack.c.bf16 %v18, %v18
  %v22 = vld [vmem:[%s3] sm:$0x1]
  %v23 = vlaneseq
  %v24 = vshrl.u32 %v23, 7
  %v25 = vsub.s32 0, %v24
  %v26 = vrot.slane %v22, %v25
  %v29 = vunpack.c.l.b16 %v19
  %v30 = vunpack.c.l.b16 %v20
  %v31 = vpack.c.b16 %v30, %v29
  %vm33 = vcmask 130048
  %v35 = vsel %vm33, %v21, 0
  %37 = vmatprep.subr.bf16.mxu0 0
  %38 = vmatpush1.bf16.msra.mxu0 0
  %39 = vmatprep.subr.bf16.mxu0 0
  %40 = vmatpush1.bf16.msra.mxu0 0
  %41 = vmatprep.subr.bf16.mxu0 0
  %42 = vmatpush1.bf16.msra.mxu0 0
  %43 = vmatprep.subr.bf16.mxu0 0
  %44 = vmatpush1.bf16.msra.mxu0 0
  %45 = vmatprep.subr.bf16.mxu0 0
  %46 = vmatpush1.bf16.msra.mxu0 0
  %47 = vmatprep.subr.bf16.mxu0 0
  %48 = vmatpush1.bf16.msra.mxu0 0
  %49 = vmatprep.subr.bf16.mxu0 0
  %50 = vmatpush1.bf16.msra.mxu0 0
  %51 = vmatprep.subr.bf16.mxu0 0
  %52 = vmatpush1.bf16.msra.mxu0 %v31
  %53 = vmatprep.subr.bf16.mxu0 0
  %54 = vmatpush2.bf16.msra.mxu0 0
  %55 = vmatprep.subr.bf16.mxu0 0
  %56 = vmatpush2.bf16.msra.mxu0 0
  %57 = vmatprep.subr.bf16.mxu0 0
  %58 = vmatpush2.bf16.msra.mxu0 0
  %59 = vmatprep.subr.bf16.mxu0 0
  %60 = vmatpush2.bf16.msra.mxu0 0
  %61 = vmatprep.subr.bf16.mxu0 0
  %62 = vmatpush2.bf16.msra.mxu0 0
  %63 = vmatprep.subr.bf16.mxu0 0
  %64 = vmatpush2.bf16.msra.mxu0 0
  %65 = vmatprep.subr.bf16.mxu0 0
  %66 = vmatpush2.bf16.msra.mxu0 0
  %67 = vmatprep.subr.bf16.mxu0 0
  %68 = vmatpush2.bf16.msra.mxu0 0
  %69 = vmatprep.mubr.bf16.mxu0 0
  %70 = vmatmul.mubr.bf16.gmra.mxu0 %v35
  %v71 = vpop.f32.mrf.mxu0
  %v72 = vadd.f32 %v26, %v71
  %v73 = vpop.f32.mrf.mxu0
  %v74 = vpop.f32.mrf.mxu0
  %v75 = vpop.f32.mrf.mxu0
  %76 = vdwg.mxu0
  %v77 = vxor.u32 %v72, 2147483648
  %v78 = vmul.f32 %v77, 1.442695
  %v79 = vpow.pop %v78
  %v80 = vadd.f32 %v79, 1.0
  %v81 = vrcp.pop %v80
  %v82 = vmul.f32 1.0, %v81
  %v83 = vmul.f32 %v72, %v82
  %v84 = vld [vmem:[%s1 + $0x8] sm:$0xf]
  %v85 = vld [vmem:[%s1 + $0xc] sm:$0xf]
  %v86 = vld [vmem:[%s1 + $0x10] sm:$0xf]
  %v87 = vld [vmem:[%s1 + $0x14] sm:$0xf]
  %v88 = vpack.c.bf16 %v83, %v83
  %v89 = vld [vmem:[%s3 + $0x1] sm:$0x1]
  %v90 = vlaneseq
  %v91 = vshrl.u32 %v90, 7
  %v92 = vsub.s32 0, %v91
  %v93 = vrot.slane %v89, %v92
  %v98 = vunpack.c.l.b16 %v84
  %v99 = vunpack.c.l.b16 %v85
  %v100 = vunpack.c.l.b16 %v86
  %v101 = vunpack.c.l.b16 %v87
  %v102 = vpack.c.b16 %v99, %v98
  %v103 = vpack.c.b16 %v101, %v100
  %vm106 = vcmask 261120
  %v108 = vsel %vm106, %v88, 0
  %110 = vmatprep.subr.bf16.mxu0 0
  %111 = vmatpush1.bf16.msra.mxu0 0
  %112 = vmatprep.subr.bf16.mxu0 0
  %113 = vmatpush1.bf16.msra.mxu0 0
  %114 = vmatprep.subr.bf16.mxu0 0
  %115 = vmatpush1.bf16.msra.mxu0 0
  %116 = vmatprep.subr.bf16.mxu0 0
  %117 = vmatpush1.bf16.msra.mxu0 0
  %118 = vmatprep.subr.bf16.mxu0 0
  %119 = vmatpush1.bf16.msra.mxu0 0
  %120 = vmatprep.subr.bf16.mxu0 0
  %121 = vmatpush1.bf16.msra.mxu0 0
  %122 = vmatprep.subr.bf16.mxu0 0
  %123 = vmatpush1.bf16.msra.mxu0 %v103
  %124 = vmatprep.subr.bf16.mxu0 0
  %125 = vmatpush1.bf16.msra.mxu0 %v102
  %126 = vmatprep.subr.bf16.mxu0 0
  %127 = vmatpush2.bf16.msra.mxu0 0
  %128 = vmatprep.subr.bf16.mxu0 0
  %129 = vmatpush2.bf16.msra.mxu0 0
  %130 = vmatprep.subr.bf16.mxu0 0
  %131 = vmatpush2.bf16.msra.mxu0 0
  %132 = vmatprep.subr.bf16.mxu0 0
  %133 = vmatpush2.bf16.msra.mxu0 0
  %134 = vmatprep.subr.bf16.mxu0 0
  %135 = vmatpush2.bf16.msra.mxu0 0
  %136 = vmatprep.subr.bf16.mxu0 0
  %137 = vmatpush2.bf16.msra.mxu0 0
  %138 = vmatprep.subr.bf16.mxu0 0
  %139 = vmatpush2.bf16.msra.mxu0 0
  %140 = vmatprep.subr.bf16.mxu0 0
  %141 = vmatpush2.bf16.msra.mxu0 0
  %142 = vmatprep.mubr.bf16.mxu0 0
  %143 = vmatmul.mubr.bf16.gmra.mxu0 %v108
  %v144 = vpop.f32.mrf.mxu0
  %v145 = vadd.f32 %v93, %v144
  %v146 = vpop.f32.mrf.mxu0
  %v147 = vpop.f32.mrf.mxu0
  %v148 = vpop.f32.mrf.mxu0
  %149 = vdwg.mxu0
  %v150 = vxor.u32 %v145, 2147483648
  %v151 = vmul.f32 %v150, 1.442695
  %v152 = vpow.pop %v151
  %v153 = vadd.f32 %v152, 1.0
  %v154 = vrcp.pop %v153
  %v155 = vmul.f32 1.0, %v154
  %v156 = vmul.f32 %v145, %v155
  %v157 = vld [vmem:[%s1 + $0x18] sm:$0xf]
  %v158 = vld [vmem:[%s1 + $0x1c] sm:$0xf]
  %v159 = vld [vmem:[%s1 + $0x20] sm:$0xf]
  %v160 = vld [vmem:[%s1 + $0x24] sm:$0xf]
  %v161 = vpack.c.bf16 %v156, %v156
  %v162 = vld [vmem:[%s3 + $0x2] sm:$0x1]
  %v163 = vlaneseq
  %v164 = vshrl.u32 %v163, 7
  %v165 = vsub.s32 0, %v164
  %v166 = vrot.slane %v162, %v165
  %v171 = vunpack.c.l.b16 %v157
  %v172 = vunpack.c.l.b16 %v158
  %v173 = vunpack.c.l.b16 %v159
  %v174 = vunpack.c.l.b16 %v160
  %v175 = vpack.c.b16 %v172, %v171
  %v176 = vpack.c.b16 %v174, %v173
  %v180 = vsel %vm106, %v161, 0
  %182 = vmatprep.subr.bf16.mxu0 0
  %183 = vmatpush1.bf16.msra.mxu0 0
  %184 = vmatprep.subr.bf16.mxu0 0
  %185 = vmatpush1.bf16.msra.mxu0 0
  %186 = vmatprep.subr.bf16.mxu0 0
  %187 = vmatpush1.bf16.msra.mxu0 0
  %188 = vmatprep.subr.bf16.mxu0 0
  %189 = vmatpush1.bf16.msra.mxu0 0
  %190 = vmatprep.subr.bf16.mxu0 0
  %191 = vmatpush1.bf16.msra.mxu0 0
  %192 = vmatprep.subr.bf16.mxu0 0
  %193 = vmatpush1.bf16.msra.mxu0 0
  %194 = vmatprep.subr.bf16.mxu0 0
  %195 = vmatpush1.bf16.msra.mxu0 %v176
  %196 = vmatprep.subr.bf16.mxu0 0
  %197 = vmatpush1.bf16.msra.mxu0 %v175
  %198 = vmatprep.subr.bf16.mxu0 0
  %199 = vmatpush2.bf16.msra.mxu0 0
  %200 = vmatprep.subr.bf16.mxu0 0
  %201 = vmatpush2.bf16.msra.mxu0 0
  %202 = vmatprep.subr.bf16.mxu0 0
  %203 = vmatpush2.bf16.msra.mxu0 0
  %204 = vmatprep.subr.bf16.mxu0 0
  %205 = vmatpush2.bf16.msra.mxu0 0
  %206 = vmatprep.subr.bf16.mxu0 0
  %207 = vmatpush2.bf16.msra.mxu0 0
  %208 = vmatprep.subr.bf16.mxu0 0
  %209 = vmatpush2.bf16.msra.mxu0 0
  %210 = vmatprep.subr.bf16.mxu0 0
  %211 = vmatpush2.bf16.msra.mxu0 0
  %212 = vmatprep.subr.bf16.mxu0 0
  %213 = vmatpush2.bf16.msra.mxu0 0
  %214 = vmatprep.mubr.bf16.mxu0 0
  %215 = vmatmul.mubr.bf16.gmra.mxu0 %v180
  %v216 = vpop.f32.mrf.mxu0
  %v217 = vadd.f32 %v166, %v216
  %v218 = vpop.f32.mrf.mxu0
  %v219 = vpop.f32.mrf.mxu0
  %v220 = vpop.f32.mrf.mxu0
  %221 = vdwg.mxu0
  %v222 = vxor.u32 %v217, 2147483648
  %v223 = vmul.f32 %v222, 1.442695
  %v224 = vpow.pop %v223
  %v225 = vadd.f32 %v224, 1.0
  %v226 = vrcp.pop %v225
  %v227 = vmul.f32 1.0, %v226
  %v228 = vmul.f32 %v217, %v227
  %v229 = vld [vmem:[%s1 + $0x28] sm:$0xf]
  %v230 = vld [vmem:[%s1 + $0x2c] sm:$0xf]
  %v231 = vld [vmem:[%s1 + $0x30] sm:$0xf]
  %v232 = vld [vmem:[%s1 + $0x34] sm:$0xf]
  %v233 = vpack.c.bf16 %v228, %v228
  %v234 = vld [vmem:[%s3 + $0x3] sm:$0x1]
  %v235 = vlaneseq
  %v236 = vshrl.u32 %v235, 7
  %v237 = vsub.s32 0, %v236
  %v238 = vrot.slane %v234, %v237
  %v243 = vunpack.c.l.b16 %v229
  %v244 = vunpack.c.l.b16 %v230
  %v245 = vunpack.c.l.b16 %v231
  %v246 = vunpack.c.l.b16 %v232
  %v247 = vpack.c.b16 %v244, %v243
  %v248 = vpack.c.b16 %v246, %v245
  %v252 = vsel %vm106, %v233, 0
  %254 = vmatprep.subr.bf16.mxu0 0
  %255 = vmatpush1.bf16.msra.mxu0 0
  %256 = vmatprep.subr.bf16.mxu0 0
  %257 = vmatpush1.bf16.msra.mxu0 0
  %258 = vmatprep.subr.bf16.mxu0 0
  %259 = vmatpush1.bf16.msra.mxu0 0
  %260 = vmatprep.subr.bf16.mxu0 0
  %261 = vmatpush1.bf16.msra.mxu0 0
  %262 = vmatprep.subr.bf16.mxu0 0
  %263 = vmatpush1.bf16.msra.mxu0 0
  %264 = vmatprep.subr.bf16.mxu0 0
  %265 = vmatpush1.bf16.msra.mxu0 0
  %266 = vmatprep.subr.bf16.mxu0 0
  %267 = vmatpush1.bf16.msra.mxu0 %v248
  %268 = vmatprep.subr.bf16.mxu0 0
  %269 = vmatpush1.bf16.msra.mxu0 %v247
  %270 = vmatprep.subr.bf16.mxu0 0
  %271 = vmatpush2.bf16.msra.mxu0 0
  %272 = vmatprep.subr.bf16.mxu0 0
  %273 = vmatpush2.bf16.msra.mxu0 0
  %274 = vmatprep.subr.bf16.mxu0 0
  %275 = vmatpush2.bf16.msra.mxu0 0
  %276 = vmatprep.subr.bf16.mxu0 0
  %277 = vmatpush2.bf16.msra.mxu0 0
  %278 = vmatprep.subr.bf16.mxu0 0
  %279 = vmatpush2.bf16.msra.mxu0 0
  %280 = vmatprep.subr.bf16.mxu0 0
  %281 = vmatpush2.bf16.msra.mxu0 0
  %282 = vmatprep.subr.bf16.mxu0 0
  %283 = vmatpush2.bf16.msra.mxu0 0
  %284 = vmatprep.subr.bf16.mxu0 0
  %285 = vmatpush2.bf16.msra.mxu0 0
  %286 = vmatprep.mubr.bf16.mxu0 0
  %287 = vmatmul.mubr.bf16.gmra.mxu0 %v252
  %v288 = vpop.f32.mrf.mxu0
  %v289 = vadd.f32 %v238, %v288
  %v290 = vpop.f32.mrf.mxu0
  %v291 = vpop.f32.mrf.mxu0
  %v292 = vpop.f32.mrf.mxu0
  %293 = vdwg.mxu0
  %v294 = vxor.u32 %v289, 2147483648
  %v295 = vmul.f32 %v294, 1.442695
  %v296 = vpow.pop %v295
  %v297 = vadd.f32 %v296, 1.0
  %v298 = vrcp.pop %v297
  %v299 = vmul.f32 1.0, %v298
  %v300 = vmul.f32 %v299, 0.5
  %v301 = vmul.f32 %v300, 1.442695
  %v302 = vpow.pop %v301
  %304 = vrot.lane.b32.xlu0 %v18, 4
  %v305 = vpop.permute.xlu0 %304
  %v307 = vmul.f32 %v302, %v305
  %309 = vrot.lane.b32.xlu0 %v307, 124
  %v310 = vpop.permute.xlu0 %309
  %v312 = vadd.f32 %v289, %v310
  %v313 = vld [vmem:[%s2] sm:$0x3]
  %v314 = vpack.c.bf16 %v312, %v312
  %v315 = vld [vmem:[%s3 + $0x4] sm:$0x1]
  %v316 = vlaneseq
  %v317 = vshrl.u32 %v316, 7
  %v318 = vsub.s32 0, %v317
  %v319 = vrot.slane %v315, %v318
  %vm320 = vcmask 31744
  %v322 = vsel %vm320, %v314, 0
  %vm324 = vcmask 1041408
  %v326 = vsel %vm324, %v313, 0
  %328 = vmatprep.subr.bf16.mxu0 0
  %329 = vmatpush1.bf16.msra.mxu0 0
  %330 = vmatprep.subr.bf16.mxu0 0
  %331 = vmatpush1.bf16.msra.mxu0 0
  %332 = vmatprep.subr.bf16.mxu0 0
  %333 = vmatpush1.bf16.msra.mxu0 0
  %334 = vmatprep.subr.bf16.mxu0 0
  %335 = vmatpush1.bf16.msra.mxu0 0
  %336 = vmatprep.subr.bf16.mxu0 0
  %337 = vmatpush1.bf16.msra.mxu0 0
  %338 = vmatprep.subr.bf16.mxu0 0
  %339 = vmatpush1.bf16.msra.mxu0 0
  %340 = vmatprep.subr.bf16.mxu0 0
  %341 = vmatpush1.bf16.msra.mxu0 0
  %342 = vmatprep.subr.bf16.mxu0 0
  %343 = vmatpush1.bf16.msra.mxu0 %v326
  %344 = vmatprep.subr.bf16.mxu0 0
  %345 = vmatpush2.bf16.msra.mxu0 0
  %346 = vmatprep.subr.bf16.mxu0 0
  %347 = vmatpush2.bf16.msra.mxu0 0
  %348 = vmatprep.subr.bf16.mxu0 0
  %349 = vmatpush2.bf16.msra.mxu0 0
  %350 = vmatprep.subr.bf16.mxu0 0
  %351 = vmatpush2.bf16.msra.mxu0 0
  %352 = vmatprep.subr.bf16.mxu0 0
  %353 = vmatpush2.bf16.msra.mxu0 0
  %354 = vmatprep.subr.bf16.mxu0 0
  %355 = vmatpush2.bf16.msra.mxu0 0
  %356 = vmatprep.subr.bf16.mxu0 0
  %357 = vmatpush2.bf16.msra.mxu0 0
  %358 = vmatprep.subr.bf16.mxu0 0
  %359 = vmatpush2.bf16.msra.mxu0 0
  %360 = vmatprep.mubr.bf16.mxu0 0
  %361 = vmatmul.mubr.bf16.gmra.mxu0 %v322
  %v362 = vpop.f32.mrf.mxu0
  %v363 = vadd.f32 %v319, %v362
  %v364 = vpop.f32.mrf.mxu0
  %v365 = vpop.f32.mrf.mxu0
  %v366 = vpop.f32.mrf.mxu0
  %367 = vdwg.mxu0
  %v368 = vxor.u32 %v363, 2147483648
  %v369 = vmul.f32 %v368, 1.442695
  %v370 = vpow.pop %v369
  %v371 = vadd.f32 %v370, 1.0
  %v372 = vrcp.pop %v371
  %v373 = vmul.f32 1.0, %v372
  %v374 = vmul.f32 %v363, %v373
  %v375 = vld [vmem:[%s2 + $0x4] sm:$0xf]
  %v376 = vld [vmem:[%s2 + $0x8] sm:$0xf]
  %v377 = vld [vmem:[%s2 + $0xc] sm:$0xf]
  %v378 = vld [vmem:[%s2 + $0x10] sm:$0xf]
  %v379 = vpack.c.bf16 %v374, %v374
  %v380 = vld [vmem:[%s3 + $0x5] sm:$0x1]
  %v381 = vlaneseq
  %v382 = vshrl.u32 %v381, 7
  %v383 = vsub.s32 0, %v382
  %v384 = vrot.slane %v380, %v383
  %v389 = vunpack.c.l.b16 %v375
  %v390 = vunpack.c.l.b16 %v376
  %v391 = vunpack.c.l.b16 %v377
  %v392 = vunpack.c.l.b16 %v378
  %v393 = vpack.c.b16 %v390, %v389
  %v394 = vpack.c.b16 %v392, %v391
  %v398 = vsel %vm106, %v379, 0
  %400 = vmatprep.subr.bf16.mxu0 0
  %401 = vmatpush1.bf16.msra.mxu0 0
  %402 = vmatprep.subr.bf16.mxu0 0
  %403 = vmatpush1.bf16.msra.mxu0 0
  %404 = vmatprep.subr.bf16.mxu0 0
  %405 = vmatpush1.bf16.msra.mxu0 0
  %406 = vmatprep.subr.bf16.mxu0 0
  %407 = vmatpush1.bf16.msra.mxu0 0
  %408 = vmatprep.subr.bf16.mxu0 0
  %409 = vmatpush1.bf16.msra.mxu0 0
  %410 = vmatprep.subr.bf16.mxu0 0
  %411 = vmatpush1.bf16.msra.mxu0 0
  %412 = vmatprep.subr.bf16.mxu0 0
  %413 = vmatpush1.bf16.msra.mxu0 %v394
  %414 = vmatprep.subr.bf16.mxu0 0
  %415 = vmatpush1.bf16.msra.mxu0 %v393
  %416 = vmatprep.subr.bf16.mxu0 0
  %417 = vmatpush2.bf16.msra.mxu0 0
  %418 = vmatprep.subr.bf16.mxu0 0
  %419 = vmatpush2.bf16.msra.mxu0 0
  %420 = vmatprep.subr.bf16.mxu0 0
  %421 = vmatpush2.bf16.msra.mxu0 0
  %422 = vmatprep.subr.bf16.mxu0 0
  %423 = vmatpush2.bf16.msra.mxu0 0
  %424 = vmatprep.subr.bf16.mxu0 0
  %425 = vmatpush2.bf16.msra.mxu0 0
  %426 = vmatprep.subr.bf16.mxu0 0
  %427 = vmatpush2.bf16.msra.mxu0 0
  %428 = vmatprep.subr.bf16.mxu0 0
  %429 = vmatpush2.bf16.msra.mxu0 0
  %430 = vmatprep.subr.bf16.mxu0 0
  %431 = vmatpush2.bf16.msra.mxu0 0
  %432 = vmatprep.mubr.bf16.mxu0 0
  %433 = vmatmul.mubr.bf16.gmra.mxu0 %v398
  %v434 = vpop.f32.mrf.mxu0
  %v435 = vadd.f32 %v384, %v434
  %v436 = vpop.f32.mrf.mxu0
  %v437 = vpop.f32.mrf.mxu0
  %v438 = vpop.f32.mrf.mxu0
  %439 = vdwg.mxu0
  %v440 = vxor.u32 %v435, 2147483648
  %v441 = vmul.f32 %v440, 1.442695
  %v442 = vpow.pop %v441
  %v443 = vadd.f32 %v442, 1.0
  %v444 = vrcp.pop %v443
  %v445 = vmul.f32 1.0, %v444
  %v446 = vmul.f32 %v435, %v445
  %v447 = vld [vmem:[%s2 + $0x14] sm:$0xf]
  %v448 = vld [vmem:[%s2 + $0x18] sm:$0xf]
  %v449 = vld [vmem:[%s2 + $0x1c] sm:$0xf]
  %v450 = vld [vmem:[%s2 + $0x20] sm:$0xf]
  %v451 = vpack.c.bf16 %v446, %v446
  %v452 = vld [vmem:[%s3 + $0x6] sm:$0x1]
  %v453 = vlaneseq
  %v454 = vshrl.u32 %v453, 7
  %v455 = vsub.s32 0, %v454
  %v456 = vrot.slane %v452, %v455
  %v461 = vunpack.c.l.b16 %v447
  %v462 = vunpack.c.l.b16 %v448
  %v463 = vunpack.c.l.b16 %v449
  %v464 = vunpack.c.l.b16 %v450
  %v465 = vpack.c.b16 %v462, %v461
  %v466 = vpack.c.b16 %v464, %v463
  %v470 = vsel %vm106, %v451, 0
  %472 = vmatprep.subr.bf16.mxu0 0
  %473 = vmatpush1.bf16.msra.mxu0 0
  %474 = vmatprep.subr.bf16.mxu0 0
  %475 = vmatpush1.bf16.msra.mxu0 0
  %476 = vmatprep.subr.bf16.mxu0 0
  %477 = vmatpush1.bf16.msra.mxu0 0
  %478 = vmatprep.subr.bf16.mxu0 0
  %479 = vmatpush1.bf16.msra.mxu0 0
  %480 = vmatprep.subr.bf16.mxu0 0
  %481 = vmatpush1.bf16.msra.mxu0 0
  %482 = vmatprep.subr.bf16.mxu0 0
  %483 = vmatpush1.bf16.msra.mxu0 0
  %484 = vmatprep.subr.bf16.mxu0 0
  %485 = vmatpush1.bf16.msra.mxu0 %v466
  %486 = vmatprep.subr.bf16.mxu0 0
  %487 = vmatpush1.bf16.msra.mxu0 %v465
  %488 = vmatprep.subr.bf16.mxu0 0
  %489 = vmatpush2.bf16.msra.mxu0 0
  %490 = vmatprep.subr.bf16.mxu0 0
  %491 = vmatpush2.bf16.msra.mxu0 0
  %492 = vmatprep.subr.bf16.mxu0 0
  %493 = vmatpush2.bf16.msra.mxu0 0
  %494 = vmatprep.subr.bf16.mxu0 0
  %495 = vmatpush2.bf16.msra.mxu0 0
  %496 = vmatprep.subr.bf16.mxu0 0
  %497 = vmatpush2.bf16.msra.mxu0 0
  %498 = vmatprep.subr.bf16.mxu0 0
  %499 = vmatpush2.bf16.msra.mxu0 0
  %500 = vmatprep.subr.bf16.mxu0 0
  %501 = vmatpush2.bf16.msra.mxu0 0
  %502 = vmatprep.subr.bf16.mxu0 0
  %503 = vmatpush2.bf16.msra.mxu0 0
  %504 = vmatprep.mubr.bf16.mxu0 0
  %505 = vmatmul.mubr.bf16.gmra.mxu0 %v470
  %v506 = vpop.f32.mrf.mxu0
  %v507 = vadd.f32 %v456, %v506
  %v508 = vpop.f32.mrf.mxu0
  %v509 = vpop.f32.mrf.mxu0
  %v510 = vpop.f32.mrf.mxu0
  %511 = vdwg.mxu0
  %v512 = vxor.u32 %v507, 2147483648
  %v513 = vmul.f32 %v512, 1.442695
  %v514 = vpow.pop %v513
  %v515 = vadd.f32 %v514, 1.0
  %v516 = vrcp.pop %v515
  %v517 = vmul.f32 1.0, %v516
  %v518 = vmul.f32 %v507, %v517
  %v519 = vld [vmem:[%s2 + $0x24] sm:$0xf]
  %v520 = vld [vmem:[%s2 + $0x28] sm:$0xf]
  %v521 = vld [vmem:[%s2 + $0x2c] sm:$0xf]
  %v522 = vld [vmem:[%s2 + $0x30] sm:$0xf]
  %v523 = vpack.c.bf16 %v518, %v518
  %v524 = vld [vmem:[%s3 + $0x7] sm:$0x1]
  %v525 = vlaneseq
  %v526 = vshrl.u32 %v525, 7
  %v527 = vsub.s32 0, %v526
  %v528 = vrot.slane %v524, %v527
  %v533 = vunpack.c.l.b16 %v519
  %v534 = vunpack.c.l.b16 %v520
  %v535 = vunpack.c.l.b16 %v521
  %v536 = vunpack.c.l.b16 %v522
  %v537 = vpack.c.b16 %v534, %v533
  %v538 = vpack.c.b16 %v536, %v535
  %v542 = vsel %vm106, %v523, 0
  %544 = vmatprep.subr.bf16.mxu0 0
  %545 = vmatpush1.bf16.msra.mxu0 0
  %546 = vmatprep.subr.bf16.mxu0 0
  %547 = vmatpush1.bf16.msra.mxu0 0
  %548 = vmatprep.subr.bf16.mxu0 0
  %549 = vmatpush1.bf16.msra.mxu0 0
  %550 = vmatprep.subr.bf16.mxu0 0
  %551 = vmatpush1.bf16.msra.mxu0 0
  %552 = vmatprep.subr.bf16.mxu0 0
  %553 = vmatpush1.bf16.msra.mxu0 0
  %554 = vmatprep.subr.bf16.mxu0 0
  %555 = vmatpush1.bf16.msra.mxu0 0
  %556 = vmatprep.subr.bf16.mxu0 0
  %557 = vmatpush1.bf16.msra.mxu0 %v538
  %558 = vmatprep.subr.bf16.mxu0 0
  %559 = vmatpush1.bf16.msra.mxu0 %v537
  %560 = vmatprep.subr.bf16.mxu0 0
  %561 = vmatpush2.bf16.msra.mxu0 0
  %562 = vmatprep.subr.bf16.mxu0 0
  %563 = vmatpush2.bf16.msra.mxu0 0
  %564 = vmatprep.subr.bf16.mxu0 0
  %565 = vmatpush2.bf16.msra.mxu0 0
  %566 = vmatprep.subr.bf16.mxu0 0
  %567 = vmatpush2.bf16.msra.mxu0 0
  %568 = vmatprep.subr.bf16.mxu0 0
  %569 = vmatpush2.bf16.msra.mxu0 0
  %570 = vmatprep.subr.bf16.mxu0 0
  %571 = vmatpush2.bf16.msra.mxu0 0
  %572 = vmatprep.subr.bf16.mxu0 0
  %573 = vmatpush2.bf16.msra.mxu0 0
  %574 = vmatprep.subr.bf16.mxu0 0
  %575 = vmatpush2.bf16.msra.mxu0 0
  %576 = vmatprep.mubr.bf16.mxu0 0
  %577 = vmatmul.mubr.bf16.gmra.mxu0 %v542
  %v578 = vpop.f32.mrf.mxu0
  %v579 = vadd.f32 %v528, %v578
  %v580 = vpop.f32.mrf.mxu0
  %v581 = vpop.f32.mrf.mxu0
  %v582 = vpop.f32.mrf.mxu0
  %583 = vdwg.mxu0
  %v584 = vxor.u32 %v579, 2147483648
  %v585 = vmul.f32 %v584, 1.442695
  %v586 = vpow.pop %v585
  %v587 = vadd.f32 %v586, 1.0
  %v588 = vrcp.pop %v587
  %v589 = vmul.f32 1.0, %v588
  %v590 = vmul.f32 %v589, 1.442695
  %v591 = vpow.pop %v590
  %592 = vst [vmem:[%s4] sm:$0xff] 0.0
  %593 = vst.msk [vmem:[%s4] sm:$0xff] %vm320, %v289
  %vm594 = vcmask 64544
  %595 = vst.msk [vmem:[%s4] sm:$0xff] %vm594, %v299
  %597 = vrot.lane.b32.xlu0 %v312, 8
  %v598 = vpop.permute.xlu0 %597
  %vm600 = vcmask 97344
  %601 = vst.msk [vmem:[%s4] sm:$0xff] %vm600, %v598
  %603 = vrot.lane.b32.xlu0 %v579, 12
  %v604 = vpop.permute.xlu0 %603
  %vm606 = vcmask 130144
  %607 = vst.msk [vmem:[%s4] sm:$0xff] %vm606, %v604
  %609 = vrot.lane.b32.xlu0 %v591, 12
  %v610 = vpop.permute.xlu0 %609
  %vm612 = vcmask 162944
  %613 = vst.msk [vmem:[%s4] sm:$0xff] %vm612, %v610
  // Predicated region
  $region18: #{renyi_div_forward.1} parent=0 // pred_check
    _
  $region19: #{renyi_div_forward.1} parent=0 // pred_check_branch
    %615 = sbr.rel (0) target = $region21
  $region20: #{renyi_div_forward.1} parent=0 // pred_region
    _
  $region21: #{renyi_div_forward.1} parent=0 // pred_fallthru
    _
  // Predicated region
  $region22: #{renyi_div_forward.1} parent=0 // pred_check
    _
  $region23: #{renyi_div_forward.1} parent=0 // pred_check_branch
    %617 = sbr.rel (0) target = $region25
  $region24: #{renyi_div_forward.1} parent=0 // pred_region
    _
  $region25: #{renyi_div_forward.1} parent=0 // pred_fallthru
    _

</llo_original>
